<compile_context>
chip_gen: v7x
topology: tpu7x:2x2x1
jax: 0.10.0
libtpu: 0.0.40
codegen_flags: <defaults>
</compile_context>

<pallas_src>
import math
import functools

import jax
import jax.numpy as jnp
from jax.experimental import pallas as pl
from jax.experimental.pallas import tpu as pltpu


@functools.lru_cache(maxsize=None)
def _roll_matches_jnp():
    """Probe pltpu.roll's rotation convention once (cached).

    Returns True iff pltpu.roll(x, s, ax) == jnp.roll(x, s, ax) (a positive
    shift moves elements towards higher indices).  Keeps the main kernel
    correct regardless of the convention of the installed jax/Mosaic version.
    """
    def probe(x_ref, o_ref):
        o_ref[...] = pltpu.roll(x_ref[...], 1, 1)

    x = jnp.arange(128, dtype=jnp.int32).reshape(1, 128)
    r = pl.pallas_call(
        probe, out_shape=jax.ShapeDtypeStruct((1, 128), jnp.int32))(x)
    return int(r[0, 0]) == 127


def _local_crf_kernel(f_ref, logit_ref, compat_ref, out_ref, *,
                      C, K, H, W, TB, roll_like_jnp):
    """One batch-block per grid step.

    f_ref:      (TB, K*K, H*W)   VMEM
    logit_ref:  (TB, C,   H*W)   VMEM
    compat_ref: (C, C)           SMEM (scalar reads)
    out_ref:    (TB, C,   H*W)   VMEM
    """
    HW = H * W
    pad = K // 2
    K2 = K * K
    N_ACC = 3                       # independent partial accumulators -> ILP

    # Per-tap border-validity mask, built ONCE per grid step, vectorized over
    # all K*K taps:  mask[i, p] = 1.0  iff the tap-i neighbour of pixel p is
    # inside the image (zero padding elsewhere).  Pre-multiplying this into F
    # replaces per-tap / per-batch selects with a single VPU multiply.
    pix = jax.lax.broadcasted_iota(jnp.int32, (K2, HW), 1)
    tap = jax.lax.broadcasted_iota(jnp.int32, (K2, HW), 0)
    x_t = pix % W + (tap % K - pad)
    y_t = pix // W + (tap // K - pad)
    border_mask = ((x_t >= 0) & (x_t < W) & (y_t >= 0) & (y_t < H)
                   ).astype(jnp.float32)                 # (K2, HW)

    for tb in range(TB):
        logit = logit_ref[tb].astype(jnp.float32)        # (C, HW)
        # Per-pixel filter weights with out-of-image taps zeroed.
        f = f_ref[tb].astype(jnp.float32) * border_mask  # (K2, HW)

        # Numerically-stable channel softmax (exp runs on the EUP slot).
        m = jnp.max(logit, axis=0, keepdims=True)
        e = jnp.exp(logit - m)
        s = jnp.sum(e, axis=0, keepdims=True)
        # approx=True would be a fully-free EUP reciprocal, but costs ~1e-3
        # relative accuracy; keep exact to preserve f32 parity with the module.
        q = e * pl.reciprocal(s, approx=False)           # (C, HW)

        # Local message passing: each KxK tap is a lane roll of Q on the
        # flattened pixel axis, fma'd with the (already masked) per-pixel
        # filter weight.  No zero-pad copy, no misaligned slices; the wrap
        # across row / image boundaries is exactly what border_mask zeroes.
        parts = [jnp.zeros((C, HW), jnp.float32) for _ in range(N_ACC)]
        for i in range(K2):
            dy, dx = i // K - pad, i % K - pad
            sft = dy * W + dx                            # want q[p + sft]
            if sft == 0:
                rolled = q
            else:
                amt = ((-sft) % HW) if roll_like_jnp else (sft % HW)
                rolled = pltpu.roll(q, amt, 1)
            parts[i % N_ACC] = parts[i % N_ACC] + f[i:i + 1, :] * rolled
        msg = parts[0]
        for pacc in parts[1:]:
            msg = msg + pacc                             # (C, HW)

        # 1x1 compatibility conv == CxC channel mix.  C is tiny, so do it as
        # SMEM-scalar * vector fmas on the VPU instead of an MXU matmul.
        msg_rows = [msg[c:c + 1, :] for c in range(C)]
        logit_rows = [logit[c:c + 1, :] for c in range(C)]
        for o in range(C):
            mix = compat_ref[o, 0] * msg_rows[0]
            for c in range(1, C):
                mix = mix + compat_ref[o, c] * msg_rows[c]
            out_ref[tb, o:o + 1, :] = (
                logit_rows[o] - mix).astype(out_ref.dtype)


def local_crf_forward(input_F, input_logit, compatibility,
                      learning_compatibility=True,
                      block_batch=None, input_cast_dtype=None):
    """JAX/Pallas equivalent of LocalCRF.forward.

    input_F:       (B, K*K, H, W)  per-pixel local filter weights
    input_logit:   (B, C,   H, W)  unary logits
    compatibility: (C, C, 1, 1)    parameter (as in the PyTorch module)
    input_cast_dtype: optionally cast the two big inputs (e.g. jnp.bfloat16)
        to halve HBM traffic on this HBM-bound kernel; accumulation stays f32.
    """
    B, K2, H, W = input_F.shape
    Bl, C, Hl, Wl = input_logit.shape
    assert (Bl, Hl, Wl) == (B, H, W)
    K = int(math.isqrt(K2))
    assert K * K == K2, "input_F.shape[1] must be a perfect square"
    HW = H * W

    if learning_compatibility:
        compat = jax.nn.sigmoid(100.0 * compatibility)
    else:
        compat = compatibility
    compat2d = compat.reshape(C, C).astype(jnp.float32)

    # Lane-dense layout: flatten (H, W) -> H*W (free, contiguous reshape).
    f_flat = input_F.reshape(B, K2, HW)
    logit_flat = input_logit.reshape(B, C, HW)
    if input_cast_dtype is not None:
        f_flat = f_flat.astype(input_cast_dtype)
        logit_flat = logit_flat.astype(input_cast_dtype)

    # Batch block: target ~1 MiB of inputs per grid step (per-step overhead is
    # ~0.35us), capped to keep the in-kernel Python unroll / trace bounded,
    # and keep >= 2 grid steps when B allows so both TensorCores on v7x (and
    # megacore chips) get work.  Default scoped VMEM limits are ample here.
    if block_batch is None:
        per_b = (K2 * f_flat.dtype.itemsize + C * logit_flat.dtype.itemsize) * HW
        tb = min(B, max(1, (1 << 20) // max(per_b, 1)))
        tb = min(tb, 16)
        while tb > 1 and B // tb < 2:
            tb -= 1
        while B % tb:
            tb -= 1
    else:
        tb = block_batch
    assert B % tb == 0
    # TODO(synk): for very large H*W (e.g. 512x1024 on v7x's 64 MiB VMEM), add
    # a second grid axis tiling H with a `pad`-row halo instead of whole images.

    kern = functools.partial(_local_crf_kernel, C=C, K=K, H=H, W=W, TB=tb,
                             roll_like_jnp=_roll_matches_jnp())

    cost = pl.CostEstimate(
        flops=B * HW * (2 * K2 * C + 2 * C * C + 4 * C),
        transcendentals=B * C * HW,
        bytes_accessed=B * HW * (K2 * f_flat.dtype.itemsize
                                 + C * logit_flat.dtype.itemsize
                                 + C * input_logit.dtype.itemsize),
    )

    out_flat = pl.pallas_call(
        kern,
        out_shape=jax.ShapeDtypeStruct((B, C, HW), input_logit.dtype),
        grid_spec=pltpu.PrefetchScalarGridSpec(
            num_scalar_prefetch=0,
            grid=(B // tb,),
            in_specs=[
                pl.BlockSpec((tb, K2, HW), lambda b: (b, 0, 0)),
                pl.BlockSpec((tb, C, HW), lambda b: (b, 0, 0)),
                # C*C compat scalars: keep in SMEM, read as scalars in-kernel.
                pl.BlockSpec(memory_space=pltpu.MemorySpace.SMEM),
            ],
            out_specs=pl.BlockSpec((tb, C, HW), lambda b: (b, 0, 0)),
        ),
        compiler_params=pltpu.CompilerParams(
            dimension_semantics=("parallel",)),
        cost_estimate=cost,
    )(f_flat, logit_flat, compat2d)

    return out_flat.reshape(B, C, H, W)


def _reference_forward(input_F, input_logit, compatibility):
    """Pure-JAX reference with identical semantics (correctness check)."""
    B, K2, H, W = input_F.shape
    C = input_logit.shape[1]
    K = int(math.isqrt(K2))
    pad = K // 2
    q = jax.nn.softmax(input_logit, axis=1)
    qp = jnp.pad(q, ((0, 0), (0, 0), (pad, pad), (pad, pad)))
    msg = jnp.zeros_like(q)
    for i in range(K2):
        dy, dx = i // K, i % K
        msg = msg + input_F[:, i:i + 1] * qp[:, :, dy:dy + H, dx:dx + W]
    compat = jax.nn.sigmoid(100.0 * compatibility).reshape(C, C)
    mixed = jnp.einsum('oc,bchw->bohw', compat, msg)
    return input_logit - mixed


if __name__ == "__main__":
    # Small shapes consistent with the module: num_category=4, 3x3 local kernel.
    B, C, H, W = 2, 4, 16, 16
    KLEN = 3
    K2 = KLEN * KLEN

    key = jax.random.PRNGKey(0)
    k_f, k_logit, k_compat = jax.random.split(key, 3)

    input_F = jax.random.uniform(k_f, (B, K2, H, W), dtype=jnp.float32)
    input_logit = jax.random.normal(k_logit, (B, C, H, W), dtype=jnp.float32)
    # nn.Parameter init: uniform(-0.05, 0.05) over shape (C, C, 1, 1).
    compatibility = jax.random.uniform(
        k_compat, (C, C, 1, 1), dtype=jnp.float32, minval=-0.05, maxval=0.05)

    out = local_crf_forward(input_F, input_logit, compatibility,
                            learning_compatibility=True)
    out = jax.block_until_ready(out)

    ref = jax.block_until_ready(
        _reference_forward(input_F, input_logit, compatibility))
    assert out.shape == (B, C, H, W)
    assert jnp.allclose(out, ref, atol=1e-4, rtol=1e-4), "mismatch vs reference"

    print("KERNEL_OK")
</pallas_src>

<mosaic_0001>
module attributes {stable_mosaic.version = 11 : i64} {
  func.func @probe(%arg0: memref<1x128xi32, #tpu.memory_space<vmem>>, %arg1: memref<1x128xi32, #tpu.memory_space<vmem>>) attributes {dimension_semantics = [], scalar_prefetch = 0 : i64, scratch_operands = 0 : i64, tpu.core_type = #tpu.core_type<tc>} {
    %c0 = arith.constant 0 : index
    %c0_0 = arith.constant 0 : index
    %0 = vector.load %arg0[%c0, %c0_0] : memref<1x128xi32, #tpu.memory_space<vmem>>, vector<1x128xi32>
    %c1_i32 = arith.constant 1 : i32
    %1 = tpu.dynamic_rotate %0 by %c1_i32 dim 1 : vector<1x128xi32>, i32 -> vector<1x128xi32>
    %c0_1 = arith.constant 0 : index
    %c0_2 = arith.constant 0 : index
    %2 = vector.load %arg1[%c0_1, %c0_2] : memref<1x128xi32, #tpu.memory_space<vmem>>, vector<1x128xi32>
    tpu.vector_store %arg1[%c0_1, %c0_2], %1 {strides = array<i32>} : memref<1x128xi32, #tpu.memory_space<vmem>>, vector<1x128xi32>,
    return
  }
}

</mosaic_0001>

<llo_original>
// kernel: tpu_custom_call.1
$region0: #{tpu_custom_call.1}
  #allocation0 [shape = 'u32[]', space=smem, size = 0x4, offset = 0x4, fixed_abs, tag = 'smem constant byte address 0x4 - core index']
  #allocation1 [shape = 'u32[144,128]{1,0:T(1,128)}', space=vmem, size = 0x12000, scoped, tag = 'internal scratch']
  %s0 = inlined_call_operand.hbm [shape: s32[1,128], index: 0, kind: input, shape index: {}]
  %s1 = inlined_call_operand.hbm [shape: s32[1,128], index: 1, kind: output, shape index: {}]
  %s2 = sld [smem:[#allocation0]]
  $region18: #{tpu_custom_call.1} parent=0
    _
  %s4 = ssub.s32 1, %s2
  %s5 = scalar_select 0, %s4, %s2
  $region1: #{tpu_custom_call.1} parent=0
    #allocation2 [shape = 'u8[512]{0}', space=vmem, size = 0x400, scoped, tag = 'input window, operand 0, single buffered']
    #allocation3 [shape = 's32[1]{0}', space=sflag, size = 0x4, scoped, tag = 'scoped memory for tpu_custom_call.1']
    #allocation4 [shape = 's32[1]{0}', space=sflag, size = 0x4, scoped, tag = 'scoped memory for tpu_custom_call.1']
    #allocation5 [shape = 'u8[512]{0}', space=vmem, size = 0x400, scoped, tag = 'output window, operand 0, single buffered']
    %6 = vsyncpa [#allocation3], 0
    %7 = vsyncpa [#allocation4], 0
    // Predicated region
    $region2: #{tpu_custom_call.1} parent=1 // pred_check
      _
    $region3: #{tpu_custom_call.1} parent=1 // pred_check_branch
      %9 = sbr.rel (0) target = $region5
    $region4: #{tpu_custom_call.1} parent=1 // pred_region
      %s11 = ssub.s32 16, 16
      %12 = vsyncadd [#allocation3], %s11
      %s14 = sshll.u32 [#allocation2], 4
      %s15 = int_to_ptr.vmem [resolvable:$true] %s14
      %17 = dma.hbm_to_vmem [thread:$0]  %s0, 16, %s15, [#allocation3]
    $region5: #{tpu_custom_call.1} parent=1 // pred_fallthru
      _
    // Predicated region
    $region6: #{tpu_custom_call.1} parent=1 // pred_check
      _
    $region7: #{tpu_custom_call.1} parent=1 // pred_check_branch
      %19 = sbr.rel (0) target = $region9
    $region8: #{tpu_custom_call.1} parent=1 // pred_region
      %20 = dma.done [#allocation3], 16
    $region9: #{tpu_custom_call.1} parent=1 // pred_fallthru
      _
    %v21 = vld [vmem:[#allocation2] sm:$0x1]
    %22 = vrot.lane.b32.xlu0 %v21, 1
    %v23 = vpop.permute.xlu0 %22
    %24 = vst [vmem:[#allocation5] sm:$0x1] %v23
    // Predicated region
    $region10: #{tpu_custom_call.1} parent=1 // pred_check
      _
    $region11: #{tpu_custom_call.1} parent=1 // pred_check_branch
      %26 = sbr.rel (0) target = $region13
    $region12: #{tpu_custom_call.1} parent=1 // pred_region
      %s28 = ssub.s32 16, 16
      %29 = vsyncadd [#allocation4], %s28
      %s31 = sshll.u32 [#allocation5], 4
      %s32 = int_to_ptr.vmem [resolvable:$true] %s31
      %34 = dma.vmem_to_hbm [thread:$0]  %s32, 16, %s1, [#allocation4]
    $region13: #{tpu_custom_call.1} parent=1 // pred_fallthru
      _
    // Predicated region
    $region14: #{tpu_custom_call.1} parent=1 // pred_check
      _
    $region15: #{tpu_custom_call.1} parent=1 // pred_check_branch
      %36 = sbr.rel (0) target = $region17
    $region16: #{tpu_custom_call.1} parent=1 // pred_region
      %37 = dma.done [#allocation4], 16
    $region17: #{tpu_custom_call.1} parent=1 // pred_fallthru
      _
    %38 = vsyncpa [#allocation3], 1
    %39 = vsyncpa [#allocation4], 1

</llo_original>
